<compile_context>
chip_gen: v7x
topology: tpu7x:2x2x1
jax: 0.10.0
libtpu: 0.0.40
codegen_flags: <defaults>
</compile_context>

<pallas_src>
import math

import jax
import jax.numpy as jnp
from jax.experimental import pallas as pl
from jax.experimental.pallas import tpu as pltpu

LANE = 128


def _round_up(n, m):
    return ((n + m - 1) // m) * m


# ---------------------------------------------------------------------------
# Kernel 1: fused QKV projection   qkv_tile = x_tile @ [Wq*scale | Wk | Wv]
# ---------------------------------------------------------------------------
def _qkv_proj_kernel(x_ref, w_ref, o_ref):
    o_ref[...] = jnp.dot(
        x_ref[...], w_ref[...], preferred_element_type=jnp.float32
    ).astype(o_ref.dtype)


# ---------------------------------------------------------------------------
# Kernel 2: flash-style causal attention (online softmax, tiled over kv).
# grid = (B, T_p // tq, T_p // tk); kv axis is the sequential reduction.
# ---------------------------------------------------------------------------
def _flash_causal_kernel(q_ref, k_ref, v_ref, o_ref, m_sc, l_sc, acc_sc):
    qi = pl.program_id(1)
    ki = pl.program_id(2)
    tq = q_ref.shape[1]
    tk = k_ref.shape[1]

    @pl.when(ki == 0)
    def _():
        m_sc[...] = jnp.full(m_sc.shape, -jnp.inf, m_sc.dtype)
        l_sc[...] = jnp.zeros(l_sc.shape, l_sc.dtype)
        acc_sc[...] = jnp.zeros(acc_sc.shape, acc_sc.dtype)

    # Skip kv blocks that lie entirely above the causal diagonal.
    @pl.when(ki * tk <= qi * tq + (tq - 1))
    def _():
        q = q_ref[0]            # (tq, d_p); 1/sqrt(d_k) already folded into Wq
        k = k_ref[0]            # (tk, d_p)
        v = v_ref[0]            # (tk, d_p)

        # s = q @ k^T on the MXU with f32 accumulation.
        s = jax.lax.dot_general(
            q, k, dimension_numbers=(((1,), (1,)), ((), ())),
            preferred_element_type=jnp.float32)            # (tq, tk)

        # Per-tile causal mask from block offsets (no full (T, T) iota).
        row = qi * tq + jax.lax.broadcasted_iota(jnp.int32, (tq, tk), 0)
        col = ki * tk + jax.lax.broadcasted_iota(jnp.int32, (tq, tk), 1)
        s = jnp.where(col > row, -jnp.inf, s)

        m_prev = m_sc[...]
        m_new = jnp.maximum(m_prev, jnp.max(s, axis=-1, keepdims=True))
        alpha = jnp.exp(m_prev - m_new)
        p = jnp.exp(s - m_new)

        l_sc[...] = alpha * l_sc[...] + jnp.sum(p, axis=-1, keepdims=True)
        acc_sc[...] = alpha * acc_sc[...] + jnp.dot(
            p.astype(v.dtype), v, preferred_element_type=jnp.float32)
        m_sc[...] = m_new

    @pl.when(ki == pl.num_programs(2) - 1)
    def _():
        inv_l = pl.reciprocal(l_sc[...], approx=True)      # EUP slot, off VALU
        o_ref[0] = (acc_sc[...] * inv_l).astype(o_ref.dtype)
    # TODO(synk): nn.Dropout on attn_weights is identity in eval mode / p=0.0;
    # training-mode dropout would need pltpu.prng_seed / prng_random_bits here.


def causal_attention(x, wq_t, wk_t, wv_t, *, tq=128, tk=128):
    """CausalAttention.forward (dropout = identity).

    x: (B, T, d_in); w*_t: (d_in, d_out) transposed nn.Linear weights (no bias).
    """
    B, T, d_in = x.shape
    d_out = wq_t.shape[1]
    dtype = x.dtype

    # Module scales by keys.shape[-1] ** 0.5 == sqrt(d_out); fold into Wq so the
    # mask sees already-scaled scores (and scaling touches O(T*d), not O(T^2)).
    scale = 1.0 / math.sqrt(d_out)

    d_in_p = _round_up(d_in, LANE)
    d_p = _round_up(d_out, LANE)
    T_p = _round_up(T, math.lcm(tq, tk))

    # Zero-pad to lane-dense / tile-aligned shapes (padding sliced off below).
    x_p = jnp.zeros((B, T_p, d_in_p), dtype).at[:, :T, :d_in].set(x)
    wq_p = jnp.zeros((d_in_p, d_p), dtype).at[:d_in, :d_out].set(
        (wq_t * scale).astype(dtype))
    wk_p = jnp.zeros((d_in_p, d_p), dtype).at[:d_in, :d_out].set(wk_t.astype(dtype))
    wv_p = jnp.zeros((d_in_p, d_p), dtype).at[:d_in, :d_out].set(wv_t.astype(dtype))
    w_qkv = jnp.concatenate([wq_p, wk_p, wv_p], axis=1)    # (d_in_p, 3*d_p)

    # ---- fused QKV projection (one lane-dense MXU matmul) -------------------
    x2 = x_p.reshape(B * T_p, d_in_p)
    qkv = pl.pallas_call(
        _qkv_proj_kernel,
        out_shape=jax.ShapeDtypeStruct((B * T_p, 3 * d_p), dtype),
        grid_spec=pltpu.PrefetchScalarGridSpec(
            num_scalar_prefetch=0,
            grid=(B * T_p // tq,),
            in_specs=[pl.BlockSpec((tq, d_in_p), lambda i: (i, 0)),
                      pl.BlockSpec((d_in_p, 3 * d_p), lambda i: (0, 0))],
            out_specs=pl.BlockSpec((tq, 3 * d_p), lambda i: (i, 0))),
        compiler_params=pltpu.CompilerParams(
            dimension_semantics=("parallel",)),
    )(x2, w_qkv)
    qkv = qkv.reshape(B, T_p, 3 * d_p)
    q = qkv[:, :, 0 * d_p:1 * d_p]
    k = qkv[:, :, 1 * d_p:2 * d_p]
    v = qkv[:, :, 2 * d_p:3 * d_p]

    # ---- flash attention -----------------------------------------------------
    out_p = pl.pallas_call(
        _flash_causal_kernel,
        out_shape=jax.ShapeDtypeStruct((B, T_p, d_p), dtype),
        grid_spec=pltpu.PrefetchScalarGridSpec(
            num_scalar_prefetch=0,
            grid=(B, T_p // tq, T_p // tk),
            in_specs=[
                pl.BlockSpec((1, tq, d_p), lambda b, qi, ki: (b, qi, 0)),
                pl.BlockSpec((1, tk, d_p), lambda b, qi, ki: (b, ki, 0)),
                pl.BlockSpec((1, tk, d_p), lambda b, qi, ki: (b, ki, 0)),
            ],
            out_specs=pl.BlockSpec((1, tq, d_p), lambda b, qi, ki: (b, qi, 0)),
            scratch_shapes=[
                pltpu.VMEM((tq, 1), jnp.float32),      # running row max
                pltpu.VMEM((tq, 1), jnp.float32),      # running row sum
                pltpu.VMEM((tq, d_p), jnp.float32),    # output accumulator
            ]),
        compiler_params=pltpu.CompilerParams(
            dimension_semantics=("parallel", "parallel", "arbitrary")),
    )(q, k, v)

    # Strip sequence / feature padding.
    return out_p[:, :T, :d_out]


def _reference(x, wq_t, wk_t, wv_t):
    """Pure-JAX replica of the PyTorch forward (dropout = identity)."""
    T = x.shape[1]
    d_out = wq_t.shape[1]
    q = x @ wq_t
    k = x @ wk_t
    v = x @ wv_t
    scores = jnp.einsum("bqe,bke->bqk", q, k)
    mask = jnp.triu(jnp.ones((T, T), bool), k=1)
    masked = jnp.where(mask[None], -jnp.inf, scores) / math.sqrt(d_out)
    return jax.nn.softmax(masked, axis=-1) @ v


if __name__ == "__main__":
    # --- exact toy shapes from the PyTorch script ---------------------------
    inputs = jnp.array(
        [[0.43, 0.15, 0.89],
         [0.55, 0.87, 0.66],
         [0.57, 0.85, 0.64],
         [0.22, 0.58, 0.33],
         [0.77, 0.25, 0.10],
         [0.05, 0.80, 0.55]], dtype=jnp.float32)
    batch = jnp.stack((inputs, inputs), axis=0)            # (2, 6, 3)

    d_in, d_out = 3, 2
    key = jax.random.PRNGKey(0)
    kq, kk, kv = jax.random.split(key, 3)
    bound = 1.0 / math.sqrt(d_in)
    wq_t = jax.random.uniform(kq, (d_in, d_out), jnp.float32, -bound, bound)
    wk_t = jax.random.uniform(kk, (d_in, d_out), jnp.float32, -bound, bound)
    wv_t = jax.random.uniform(kv, (d_in, d_out), jnp.float32, -bound, bound)

    out = jax.block_until_ready(causal_attention(batch, wq_t, wk_t, wv_t))
    ref = _reference(batch, wq_t, wk_t, wv_t)
    assert bool(jnp.allclose(out, ref, atol=2e-3, rtol=2e-3)), (out, ref)

    # --- multi-tile sanity check (exercises padding + causal block skipping) -
    B2, T2, di2, do2 = 2, 320, 16, 8
    k1, k2, k3, k4 = jax.random.split(jax.random.PRNGKey(0), 4)
    x2 = jax.random.normal(k1, (B2, T2, di2), jnp.float32)
    b2 = 1.0 / math.sqrt(di2)
    wq2 = jax.random.uniform(k2, (di2, do2), jnp.float32, -b2, b2)
    wk2 = jax.random.uniform(k3, (di2, do2), jnp.float32, -b2, b2)
    wv2 = jax.random.uniform(k4, (di2, do2), jnp.float32, -b2, b2)

    out2 = jax.block_until_ready(causal_attention(x2, wq2, wk2, wv2))
    ref2 = _reference(x2, wq2, wk2, wv2)
    assert bool(jnp.allclose(out2, ref2, atol=2e-3, rtol=2e-3))

    print("KERNEL_OK")
</pallas_src>

<mosaic_0001>
module attributes {stable_mosaic.version = 11 : i64} {
  func.func @_qkv_proj_kernel(%arg0: i32, %arg1: memref<128x128xf32, #tpu.memory_space<vmem>>, %arg2: memref<128x384xf32, #tpu.memory_space<vmem>>, %arg3: memref<128x384xf32, #tpu.memory_space<vmem>>) attributes {dimension_semantics = [#tpu.dimension_semantics<parallel>], iteration_bounds = array<i64: 2>, scalar_prefetch = 0 : i64, scratch_operands = 0 : i64, tpu.core_type = #tpu.core_type<tc>, window_params = [{transform_indices = @transform_0, window_bounds = array<i64: 128, 128>}, {pipeline_mode = #tpu.pipeline_mode<synchronous>, transform_indices = @transform_1, window_bounds = array<i64: 128, 384>}, {transform_indices = @transform_2, window_bounds = array<i64: 128, 384>}]} {
    %c0 = arith.constant 0 : index
    %c0_0 = arith.constant 0 : index
    %0 = vector.load %arg1[%c0, %c0_0] : memref<128x128xf32, #tpu.memory_space<vmem>>, vector<128x128xf32>
    %c0_1 = arith.constant 0 : index
    %c0_2 = arith.constant 0 : index
    %1 = vector.load %arg2[%c0_1, %c0_2] : memref<128x384xf32, #tpu.memory_space<vmem>>, vector<128x384xf32>
    %cst = arith.constant dense<0.000000e+00> : vector<128x384xf32>
    %2 = tpu.matmul %0, %1, %cst {dimension_numbers = #tpu.dot_dimension_numbers<[1], [0], [0], [1], [0, 0, 1, 1], [], []>} : vector<128x128xf32>, vector<128x384xf32>, vector<128x384xf32> -> vector<128x384xf32>
    %c0_3 = arith.constant 0 : index
    %c0_4 = arith.constant 0 : index
    %3 = vector.load %arg3[%c0_3, %c0_4] : memref<128x384xf32, #tpu.memory_space<vmem>>, vector<128x384xf32>
    tpu.vector_store %arg3[%c0_3, %c0_4], %2 {strides = array<i32>} : memref<128x384xf32, #tpu.memory_space<vmem>>, vector<128x384xf32>,
    return
  }
  func.func @transform_0(%arg0: i32) -> (i32, i32) {
    %c0_i32 = arith.constant 0 : i32
    %c0_i32_0 = arith.constant 0 : i32
    return %arg0, %c0_i32 : i32, i32
  }
  func.func @transform_1(%arg0: i32) -> (i32, i32) {
    %c0_i32 = arith.constant 0 : i32
    %c0_i32_0 = arith.constant 0 : i32
    %c0_i32_1 = arith.constant 0 : i32
    return %c0_i32, %c0_i32_0 : i32, i32
  }
  func.func @transform_2(%arg0: i32) -> (i32, i32) {
    %c0_i32 = arith.constant 0 : i32
    %c0_i32_0 = arith.constant 0 : i32
    return %arg0, %c0_i32 : i32, i32
  }
}

</mosaic_0001>

<llo_original>
// kernel: tpu_custom_call.1
$region0: #{tpu_custom_call.1}
  #allocation0 [shape = 'u32[]', space=smem, size = 0x4, offset = 0x4, fixed_abs, tag = 'smem constant byte address 0x4 - core index']
  #allocation1 [shape = 'u32[144,128]{1,0:T(1,128)}', space=vmem, size = 0x12000, scoped, tag = 'internal scratch']
  %s0 = inlined_call_operand.hbm [shape: f32[256,128], index: 0, kind: input, shape index: {}]
  %s1 = inlined_call_operand.hbm [shape: f32[128,384], index: 1, kind: input, shape index: {}]
  %s2 = inlined_call_operand.hbm [shape: f32[256,384], index: 2, kind: output, shape index: {}]
  %s3 = sld [smem:[#allocation0]]
  $region49: #{tpu_custom_call.1} parent=0
    _
  %s5 = ssub.s32 1, %s3
  %s6 = scalar_select 0, %s5, %s3
  $region1: #{tpu_custom_call.1} parent=0
    #allocation2 [shape = 'u8[131072]{0}', space=vmem, size = 0x20000, scoped, tag = 'input window, operand 0']
    #allocation3 [shape = 's32[2]{0}', space=sflag, size = 0x8, scoped, tag = 'scoped memory for tpu_custom_call.1']
    #allocation4 [shape = 's32[2]{0}', space=sflag, size = 0x8, scoped, tag = 'scoped memory for tpu_custom_call.1']
    #allocation5 [shape = 'u8[196608]{0}', space=vmem, size = 0x30000, scoped, tag = 'input window, operand 1, single buffered']
    #allocation6 [shape = 's32[1]{0}', space=sflag, size = 0x4, scoped, tag = 'scoped memory for tpu_custom_call.1']
    #allocation7 [shape = 'u8[393216]{0}', space=vmem, size = 0x60000, scoped, tag = 'output window, operand 0']
    %7 = vsyncpa [#allocation3], 0
    %s8 = scalar_lea.sflag [#allocation3], 1
    %9 = vsyncpa %s8, 0
    %10 = vsyncpa [#allocation6], 0
    %11 = vsyncpa [#allocation4], 0
    %s12 = scalar_lea.sflag [#allocation4], 1
    %13 = vsyncpa %s12, 0
    loop: start=0, step=1, limit=4
    $region2: #{tpu_custom_call.1} parent=1 // loop_pre_header
      _
    $region3: #{tpu_custom_call.1} parent=1 // loop_header
      %s15 = sphi 0, %s19
      %p16 = scmp.ge.s32.totalorder %s15, 4
      %s25 = sphi 0, %s27
      %s28 = sphi 0, %s25
      %s29 = sphi 0, %s28
      %s45 = sphi 0, %s29
      %s49 = sphi 0, %s49
      %s51 = sphi 0, %s49
      %s52 = sphi 0, %s51
      %s66 = sphi 0, %s52
      %s72 = sphi 0, %s74
      %s75 = sphi 0, %s72
      %s76 = sphi 0, %s75
      %s92 = sphi 0, %s76
    $region4: #{tpu_custom_call.1} parent=1 // loop_header_branch
      %18 = sbr.rel (%p16) target = $region8
    $region5: #{tpu_custom_call.1} parent=1 // loop_body
      %s20 = ssub.s32 %s15, 1
      %s21 = ssub.s32 %s15, 2
      %s22 = sadd.s32 %s15, 1
      %s23 = ssub.s32 %s15, %s22
      %p24 = scmp.eq.s32.totalorder %s23, 0
      %s26 = sadd.s32 %s25, 1
      %s27 = scalar_select %p24, %s25, %s26
      %p30 = pneg %p24
      %p31 = scmp.eq.s32.totalorder %s15, 1
      %p32 = por %p30, %p31
      %p33 = scmp.ne.s32.totalorder %s25, %s28
      %p34 = scmp.eq.s32.totalorder %s15, 0
      %p35 = por %p33, %p34
      %p36 = scmp.ne.s32.totalorder %s25, %s28
      %p37 = scmp.eq.s32.totalorder %s20, 1
      %p38 = por %p36, %p37
      %p39 = scmp.ne.s32.totalorder %s28, %s29
      %p40 = scmp.eq.s32.totalorder %s20, 0
      %p41 = por %p39, %p40
      %p42 = scmp.ne.s32.totalorder %s28, %s29
      %p43 = scmp.eq.s32.totalorder %s21, 1
      %p44 = por %p42, %p43
      %p46 = scmp.ne.s32.totalorder %s29, %s45
      %p47 = scmp.eq.s32.totalorder %s21, 0
      %p48 = por %p46, %p47
      %s50 = sadd.s32 %s49, 1
      %p53 = scmp.eq.s32.totalorder %s15, 1
      %p54 = scmp.ne.s32.totalorder %s49, %s51
      %p55 = scmp.eq.s32.totalorder %s15, 0
      %p56 = por %p54, %p55
      %p57 = scmp.ne.s32.totalorder %s49, %s51
      %p58 = scmp.eq.s32.totalorder %s20, 1
      %p59 = por %p57, %p58
      %p60 = scmp.ne.s32.totalorder %s51, %s52
      %p61 = scmp.eq.s32.totalorder %s20, 0
      %p62 = por %p60, %p61
      %p63 = scmp.ne.s32.totalorder %s51, %s52
      %p64 = scmp.eq.s32.totalorder %s21, 1
      %p65 = por %p63, %p64
      %p67 = scmp.ne.s32.totalorder %s52, %s66
      %p68 = scmp.eq.s32.totalorder %s21, 0
      %p69 = por %p67, %p68
      %s70 = ssub.s32 %s15, %s22
      %p71 = scmp.eq.s32.totalorder %s70, 0
      %s73 = sadd.s32 %s72, 1
      %s74 = scalar_select %p71, %s72, %s73
      %p77 = pneg %p71
      %p78 = scmp.eq.s32.totalorder %s15, 1
      %p79 = por %p77, %p78
      %p80 = scmp.ne.s32.totalorder %s72, %s75
      %p81 = scmp.eq.s32.totalorder %s15, 0
      %p82 = por %p80, %p81
      %p83 = scmp.ne.s32.totalorder %s72, %s75
      %p84 = scmp.eq.s32.totalorder %s20, 1
      %p85 = por %p83, %p84
      %p86 = scmp.ne.s32.totalorder %s75, %s76
      %p87 = scmp.eq.s32.totalorder %s20, 0
      %p88 = por %p86, %p87
      %p89 = scmp.ne.s32.totalorder %s75, %s76
      %p90 = scmp.eq.s32.totalorder %s21, 1
      %p91 = por %p89, %p90
      %p93 = scmp.ne.s32.totalorder %s76, %s92
      %p94 = scmp.eq.s32.totalorder %s21, 0
      %p95 = por %p93, %p94
      %p96 = scmp.le.s32.totalorder 1, %s15
      %p97 = scmp.lt.s32.totalorder %s15, 3
      %p98 = pnand %p96, %p97
      %p99 = pneg %p98
      // Predicated region
      $region9: #{tpu_custom_call.1} parent=5 // pred_check
        _
      $region10: #{tpu_custom_call.1} parent=5 // pred_check_branch
        %101 = sbr.rel (%p98) target = $region12
      $region11: #{tpu_custom_call.1} parent=5 // pred_region
        %s102 = ssub.s32 %s15, 1
        // Predicated region
        $region13: #{tpu_custom_call.1} parent=11 // pred_check
          %p103 = pneg %p62
        $region14: #{tpu_custom_call.1} parent=11 // pred_check_branch
          %105 = sbr.rel (%p103) target = $region16
        $region15: #{tpu_custom_call.1} parent=11 // pred_region
          %s107 = ssub.s32 6144, 6144
          %108 = vsyncadd [#allocation6], %s107
          %s109 = sshll.u32 [#allocation5], 4
          %s110 = int_to_ptr.vmem [resolvable:$true] %s109
          %115 = dma.hbm_to_vmem [thread:$0]  %s1, 6144, %s110, [#allocation6], 384, 384, 24
        $region16: #{tpu_custom_call.1} parent=11 // pred_fallthru
          _
      $region12: #{tpu_custom_call.1} parent=5 // pred_fallthru
        _
      %p116 = scmp.lt.s32.totalorder %s15, 2
      // Predicated region
      $region17: #{tpu_custom_call.1} parent=5 // pred_check
        %p117 = pneg %p116
      $region18: #{tpu_custom_call.1} parent=5 // pred_check_branch
        %119 = sbr.rel (%p117) target = $region20
      $region19: #{tpu_custom_call.1} parent=5 // pred_region
        // Predicated region
        $region21: #{tpu_custom_call.1} parent=19 // pred_check
          %p120 = pneg %p35
        $region22: #{tpu_custom_call.1} parent=19 // pred_check_branch
          %122 = sbr.rel (%p120) target = $region24
        $region23: #{tpu_custom_call.1} parent=19 // pred_region
          %s123 = sand.u32 %s25, 1
          %s124 = scalar_lea.sflag [#allocation3], %s123
          %s125 = sand.u32 %s25, 1
          %s126 = smul.addr %s125, 128
          %s127 = scalar_lea.vmem [#allocation2], %s126
          %s128 = smul.u32 16, %s15
          %s130 = ssub.s32 2048, 2048
          %131 = vsyncadd %s124, %s130
          %s132 = smul.addr %s128, 128
          %s133 = scalar_lea.hbm %s0, %s132
          %s134 = sshll.u32 %s127, 4
          %s135 = int_to_ptr.vmem [resolvable:$true] %s134
          %140 = dma.hbm_to_vmem [thread:$0]  %s133, 2048, %s135, %s124, 128, 128, 8
        $region24: #{tpu_custom_call.1} parent=19 // pred_fallthru
          _
      $region20: #{tpu_custom_call.1} parent=5 // pred_fallthru
        _
      %p141 = scmp.le.s32.totalorder 1, %s15
      %p142 = scmp.lt.s32.totalorder %s15, 3
      %p143 = pnand %p141, %p142
      %p144 = pneg %p143
      // Predicated region
      $region25: #{tpu_custom_call.1} parent=5 // pred_check
        _
      $region26: #{tpu_custom_call.1} parent=5 // pred_check_branch
        %146 = sbr.rel (%p143) target = $region28
      $region27: #{tpu_custom_call.1} parent=5 // pred_region
        %s147 = ssub.s32 %s15, 1
        %s148 = sand.u32 %s28, 1
        %s149 = scalar_lea.sflag [#allocation3], %s148
        %s150 = sand.u32 %s28, 1
        %s151 = smul.addr %s150, 128
        %s152 = scalar_lea.vmem [#allocation2], %s151
        // Predicated region
        $region29: #{tpu_custom_call.1} parent=27 // pred_check
          %p153 = pneg %p41
        $region30: #{tpu_custom_call.1} parent=27 // pred_check_branch
          %155 = sbr.rel (%p153) target = $region32
        $region31: #{tpu_custom_call.1} parent=27 // pred_region
          %156 = dma.done %s149, 2048
        $region32: #{tpu_custom_call.1} parent=27 // pred_fallthru
          _
        // Predicated region
        $region33: #{tpu_custom_call.1} parent=27 // pred_check
          %p157 = pneg %p62
        $region34: #{tpu_custom_call.1} parent=27 // pred_check_branch
          %159 = sbr.rel (%p157) target = $region36
        $region35: #{tpu_custom_call.1} parent=27 // pred_region
          %160 = dma.done [#allocation6], 6144
        $region36: #{tpu_custom_call.1} parent=27 // pred_fallthru
          _
        %s161 = sand.u32 %s28, 1
        %s162 = scalar_lea.sflag [#allocation3], %s161
        %s163 = sand.u32 %s28, 1
        %s164 = smul.addr %s163, 128
        %s165 = scalar_lea.vmem [#allocation2], %s164
        %p166 = pneg %p41
        %p167 = pneg %p38
        %p168 = pneg %p62
        %p169 = pneg %p59
        %p170 = pneg %p88
        %p171 = pneg %p85
        %s172 = sand.u32 %s75, 1
        %s173 = scalar_lea.sflag [#allocation4], %s172
        %s174 = sand.u32 %s75, 1
        %s175 = smul.addr %s174, 384
        %s176 = scalar_lea.vmem [#allocation7], %s175
        %s177 = smul.u32 16, %s20
        %s178 = smul.u32 16, %s20
        %v179 = vld [vmem:[%s152] sm:$0xff]
        %v180 = vld [vmem:[%s152 + $0x8] sm:$0xff]
        %v181 = vld [vmem:[%s152 + $0x10] sm:$0xff]
        %v182 = vld [vmem:[%s152 + $0x18] sm:$0xff]
        %v183 = vld [vmem:[%s152 + $0x20] sm:$0xff]
        %v184 = vld [vmem:[%s152 + $0x28] sm:$0xff]
        %v185 = vld [vmem:[%s152 + $0x30] sm:$0xff]
        %v186 = vld [vmem:[%s152 + $0x38] sm:$0xff]
        %v187 = vld [vmem:[%s152 + $0x40] sm:$0xff]
        %v188 = vld [vmem:[%s152 + $0x48] sm:$0xff]
        %v189 = vld [vmem:[%s152 + $0x50] sm:$0xff]
        %v190 = vld [vmem:[%s152 + $0x58] sm:$0xff]
        %v191 = vld [vmem:[%s152 + $0x60] sm:$0xff]
        %v192 = vld [vmem:[%s152 + $0x68] sm:$0xff]
        %v193 = vld [vmem:[%s152 + $0x70] sm:$0xff]
        %v194 = vld [vmem:[%s152 + $0x78] sm:$0xff]
        %v195 = vld [vmem:[#allocation5] sm:$0xff]
        %v196 = vld [vmem:[#allocation5 + $0x8] sm:$0xff]
        %v197 = vld [vmem:[#allocation5 + $0x10] sm:$0xff]
        %v198 = vld [vmem:[#allocation5 + $0x18] sm:$0xff]
        %v199 = vld [vmem:[#allocation5 + $0x20] sm:$0xff]
        %v200 = vld [vmem:[#allocation5 + $0x28] sm:$0xff]
        %v201 = vld [vmem:[#allocation5 + $0x30] sm:$0xff]
        %v202 = vld [vmem:[#allocation5 + $0x38] sm:$0xff]
        %v203 = vld [vmem:[#allocation5 + $0x40] sm:$0xff]
        %v204 = vld [vmem:[#allocation5 + $0x48] sm:$0xff]
        %v205 = vld [vmem:[#allocation5 + $0x50] sm:$0xff]
        %v206 = vld [vmem:[#allocation5 + $0x58] sm:$0xff]
        %v207 = vld [vmem:[#allocation5 + $0x60] sm:$0xff]
        %v208 = vld [vmem:[#allocation5 + $0x68] sm:$0xff]
        %v209 = vld [vmem:[#allocation5 + $0x70] sm:$0xff]
        %v210 = vld [vmem:[#allocation5 + $0x78] sm:$0xff]
        %v211 = vld [vmem:[#allocation5 + $0x80] sm:$0xff]
        %v212 = vld [vmem:[#allocation5 + $0x88] sm:$0xff]
        %v213 = vld [vmem:[#allocation5 + $0x90] sm:$0xff]
        %v214 = vld [vmem:[#allocation5 + $0x98] sm:$0xff]
        %v215 = vld [vmem:[#allocation5 + $0xa0] sm:$0xff]
        %v216 = vld [vmem:[#allocation5 + $0xa8] sm:$0xff]
        %v217 = vld [vmem:[#allocation5 + $0xb0] sm:$0xff]
        %v218 = vld [vmem:[#allocation5 + $0xb8] sm:$0xff]
        %v219 = vld [vmem:[#allocation5 + $0xc0] sm:$0xff]
        %v220 = vld [vmem:[#allocation5 + $0xc8] sm:$0xff]
        %v221 = vld [vmem:[#allocation5 + $0xd0] sm:$0xff]
        %v222 = vld [vmem:[#allocation5 + $0xd8] sm:$0xff]
        %v223 = vld [vmem:[#allocation5 + $0xe0] sm:$0xff]
        %v224 = vld [vmem:[#allocation5 + $0xe8] sm:$0xff]
        %v225 = vld [vmem:[#allocation5 + $0xf0] sm:$0xff]
        %v226 = vld [vmem:[#allocation5 + $0xf8] sm:$0xff]
        %v227 = vld [vmem:[#allocation5 + $0x100] sm:$0xff]
        %v228 = vld [vmem:[#allocation5 + $0x108] sm:$0xff]
        %v229 = vld [vmem:[#allocation5 + $0x110] sm:$0xff]
        %v230 = vld [vmem:[#allocation5 + $0x118] sm:$0xff]
        %v231 = vld [vmem:[#allocation5 + $0x120] sm:$0xff]
        %v232 = vld [vmem:[#allocation5 + $0x128] sm:$0xff]
        %v233 = vld [vmem:[#allocation5 + $0x130] sm:$0xff]
        %v234 = vld [vmem:[#allocation5 + $0x138] sm:$0xff]
        %v235 = vld [vmem:[#allocation5 + $0x140] sm:$0xff]
        %v236 = vld [vmem:[#allocation5 + $0x148] sm:$0xff]
        %v237 = vld [vmem:[#allocation5 + $0x150] sm:$0xff]
        %v238 = vld [vmem:[#allocation5 + $0x158] sm:$0xff]
        %v239 = vld [vmem:[#allocation5 + $0x160] sm:$0xff]
        %v240 = vld [vmem:[#allocation5 + $0x168] sm:$0xff]
        %v241 = vld [vmem:[#allocation5 + $0x170] sm:$0xff]
        %v242 = vld [vmem:[#allocation5 + $0x178] sm:$0xff]
        %243 = vmatprep.subr.mxu0 %v196
        %244 = vmatpush1.msra.mxu0 %v195
        %245 = vmatprep.subr.mxu0 %v199
        %246 = vmatpush1.msra.mxu0 %v198
        %247 = vmatprep.subr.mxu0 %v202
        %248 = vmatpush1.msra.mxu0 %v201
        %249 = vmatprep.subr.mxu0 %v205
        %250 = vmatpush1.msra.mxu0 %v204
        %251 = vmatprep.subr.mxu0 %v208
        %252 = vmatpush1.msra.mxu0 %v207
        %253 = vmatprep.subr.mxu0 %v211
        %254 = vmatpush1.msra.mxu0 %v210
        %255 = vmatprep.subr.mxu0 %v214
        %256 = vmatpush1.msra.mxu0 %v213
        %257 = vmatprep.subr.mxu0 %v217
        %258 = vmatpush1.msra.mxu0 %v216
        %259 = vmatprep.subr.mxu0 %v220
        %260 = vmatpush1.msra.mxu0 %v219
        %261 = vmatprep.subr.mxu0 %v223
        %262 = vmatpush1.msra.mxu0 %v222
        %263 = vmatprep.subr.mxu0 %v226
        %264 = vmatpush1.msra.mxu0 %v225
        %265 = vmatprep.subr.mxu0 %v229
        %266 = vmatpush1.msra.mxu0 %v228
        %267 = vmatprep.subr.mxu0 %v232
        %268 = vmatpush1.msra.mxu0 %v231
        %269 = vmatprep.subr.mxu0 %v235
        %270 = vmatpush1.msra.mxu0 %v234
        %271 = vmatprep.subr.mxu0 %v238
        %272 = vmatpush1.msra.mxu0 %v237
        %273 = vmatprep.subr.mxu0 %v241
        %274 = vmatpush1.msra.mxu0 %v240
        %275 = vmatprep.subr.mxu0 0.0
        %276 = vmatpush1.msra.mxu0 0.0
        %277 = vmatprep.subr.mxu0 0.0
        %278 = vmatpush1.msra.mxu0 0.0
        %279 = vmatprep.subr.mxu0 0.0
        %280 = vmatpush1.msra.mxu0 0.0
        %281 = vmatprep.subr.mxu0 0.0
        %282 = vmatpush1.msra.mxu0 0.0
        %283 = vmatprep.subr.mxu0 0.0
        %284 = vmatpush1.msra.mxu0 0.0
        %285 = vmatprep.subr.mxu0 0.0
        %286 = vmatpush1.msra.mxu0 0.0
        %287 = vmatprep.subr.mxu0 0.0
        %288 = vmatpush1.msra.mxu0 0.0
        %289 = vmatprep.subr.mxu0 0.0
        %290 = vmatpush1.msra.mxu0 0.0
        %291 = vmatprep.subr.mxu0 0.0
        %292 = vmatpush1.msra.mxu0 0.0
        %293 = vmatprep.subr.mxu0 0.0
        %294 = vmatpush1.msra.mxu0 0.0
        %295 = vmatprep.subr.mxu0 0.0
        %296 = vmatpush1.msra.mxu0 0.0
        %297 = vmatprep.subr.mxu0 0.0
        %298 = vmatpush1.msra.mxu0 0.0
        %299 = vmatprep.subr.mxu0 0.0
        %300 = vmatpush1.msra.mxu0 0.0
        %301 = vmatprep.subr.mxu0 0.0
        %302 = vmatpush1.msra.mxu0 0.0
        %303 = vmatprep.subr.mxu0 0.0
        %304 = vmatpush1.msra.mxu0 0.0
        %305 = vmatprep.subr.mxu0 0.0
        %306 = vmatpush1.msra.mxu0 0.0
        %307 = vmatprep.mubr.f32.mxu0 0.0
        %308 = vmatmul.mubr.f32.gmra.mrb[0].mxu0 %v179
        %v309 = vpop.f32.mrb[0].mxu0
        %v310 = vadd.f32 0.0, %v309
        %v311 = vpop.f32.mrb[0].mxu0
        %v312 = vadd.f32 0.0, %v311
        %313 = vmatprep.mubr.f32.mxu0 0.0
        %314 = vmatmul.mubr.f32.gmra.mrb[0].mxu0 %v180
        %v315 = vpop.f32.mrb[0].mxu0
        %v316 = vadd.f32 0.0, %v315
        %v317 = vpop.f32.mrb[0].mxu0
        %v318 = vadd.f32 0.0, %v317
        %319 = vmatprep.mubr.f32.mxu0 0.0
        %320 = vmatmul.mubr.f32.gmra.mrb[0].mxu0 %v181
        %v321 = vpop.f32.mrb[0].mxu0
        %v322 = vadd.f32 0.0, %v321
        %v323 = vpop.f32.mrb[0].mxu0
        %v324 = vadd.f32 0.0, %v323
        %325 = vmatprep.mubr.f32.mxu0 0.0
        %326 = vmatmul.mubr.f32.gmra.mrb[0].mxu0 %v182
        %v327 = vpop.f32.mrb[0].mxu0
        %v328 = vadd.f32 0.0, %v327
        %v329 = vpop.f32.mrb[0].mxu0
        %v330 = vadd.f32 0.0, %v329
        %331 = vmatprep.mubr.f32.mxu0 0.0
        %332 = vmatmul.mubr.f32.gmra.mrb[0].mxu0 %v183
        %v333 = vpop.f32.mrb[0].mxu0
        %v334 = vadd.f32 0.0, %v333
        %v335 = vpop.f32.mrb[0].mxu0
        %v336 = vadd.f32 0.0, %v335
        %337 = vmatprep.mubr.f32.mxu0 0.0
        %338 = vmatmul.mubr.f32.gmra.mrb[0].mxu0 %v184
        %v339 = vpop.f32.mrb[0].mxu0
        %v340 = vadd.f32 0.0, %v339
        %v341 = vpop.f32.mrb[0].mxu0
        %v342 = vadd.f32 0.0, %v341
        %343 = vmatprep.mubr.f32.mxu0 0.0
        %344 = vmatmul.mubr.f32.gmra.mrb[0].mxu0 %v185
        %v345 = vpop.f32.mrb[0].mxu0
        %v346 = vadd.f32 0.0, %v345
        %v347 = vpop.f32.mrb[0].mxu0
        %v348 = vadd.f32 0.0, %v347
        %349 = vmatprep.mubr.f32.mxu0 0.0
        %350 = vmatmul.mubr.f32.gmra.mrb[0].mxu0 %v186
        %v351 = vpop.f32.mrb[0].mxu0
        %v352 = vadd.f32 0.0, %v351
        %v353 = vpop.f32.mrb[0].mxu0
        %v354 = vadd.f32 0.0, %v353
        %355 = vmatprep.mubr.f32.mxu0 0.0
        %356 = vmatmul.mubr.f32.gmra.mrb[0].mxu0 %v187
        %v357 = vpop.f32.mrb[0].mxu0
        %v358 = vadd.f32 0.0, %v357
        %v359 = vpop.f32.mrb[0].mxu0
        %v360 = vadd.f32 0.0, %v359
        %361 = vmatprep.mubr.f32.mxu0 0.0
        %362 = vmatmul.mubr.f32.gmra.mrb[0].mxu0 %v188
        %v363 = vpop.f32.mrb[0].mxu0
        %v364 = vadd.f32 0.0, %v363
        %v365 = vpop.f32.mrb[0].mxu0
        %v366 = vadd.f32 0.0, %v365
        %367 = vmatprep.mubr.f32.mxu0 0.0
        %368 = vmatmul.mubr.f32.gmra.mrb[0].mxu0 %v189
        %v369 = vpop.f32.mrb[0].mxu0
        %v370 = vadd.f32 0.0, %v369
        %v371 = vpop.f32.mrb[0].mxu0
        %v372 = vadd.f32 0.0, %v371
        %373 = vmatprep.mubr.f32.mxu0 0.0
        %374 = vmatmul.mubr.f32.gmra.mrb[0].mxu0 %v190
        %v375 = vpop.f32.mrb[0].mxu0
        %v376 = vadd.f32 0.0, %v375
        %v377 = vpop.f32.mrb[0].mxu0
        %v378 = vadd.f32 0.0, %v377
        %379 = vmatprep.mubr.f32.mxu0 0.0
        %380 = vmatmul.mubr.f32.gmra.mrb[0].mxu0 %v191
        %v381 = vpop.f32.mrb[0].mxu0
        %v382 = vadd.f32 0.0, %v381
        %v383 = vpop.f32.mrb[0].mxu0
        %v384 = vadd.f32 0.0, %v383
        %385 = vmatprep.mubr.f32.mxu0 0.0
        %386 = vmatmul.mubr.f32.gmra.mrb[0].mxu0 %v192
        %v387 = vpop.f32.mrb[0].mxu0
        %v388 = vadd.f32 0.0, %v387
        %v389 = vpop.f32.mrb[0].mxu0
        %v390 = vadd.f32 0.0, %v389
        %391 = vmatprep.mubr.f32.mxu0 0.0
        %392 = vmatmul.mubr.f32.gmra.mrb[0].mxu0 %v193
        %v393 = vpop.f32.mrb[0].mxu0
        %v394 = vadd.f32 0.0, %v393
        %v395 = vpop.f32.mrb[0].mxu0
        %v396 = vadd.f32 0.0, %v395
        %397 = vmatprep.mubr.f32.mxu0 0.0
        %398 = vmatmul.mubr.f32.gmra.mrb[0].mxu0 %v194
        %v399 = vpop.f32.mrb[0].mxu0
        %v400 = vadd.f32 0.0, %v399
        %v401 = vpop.f32.mrb[0].mxu0
        %v402 = vadd.f32 0.0, %v401
        %403 = vdwg.mxu0
        %404 = vmatprep.subr.mxu0 0.0
        %405 = vmatpush1.msra.mxu0 %v197
        %406 = vmatprep.subr.mxu0 0.0
        %407 = vmatpush1.msra.mxu0 %v200
        %408 = vmatprep.subr.mxu0 0.0
        %409 = vmatpush1.msra.mxu0 %v203
        %410 = vmatprep.subr.mxu0 0.0
        %411 = vmatpush1.msra.mxu0 %v206
        %412 = vmatprep.subr.mxu0 0.0
        %413 = vmatpush1.msra.mxu0 %v209
        %414 = vmatprep.subr.mxu0 0.0
        %415 = vmatpush1.msra.mxu0 %v212
        %416 = vmatprep.subr.mxu0 0.0
        %417 = vmatpush1.msra.mxu0 %v215
        %418 = vmatprep.subr.mxu0 0.0
        %419 = vmatpush1.msra.mxu0 %v218
        %420 = vmatprep.subr.mxu0 0.0
        %421 = vmatpush1.msra.mxu0 %v221
        %422 = vmatprep.subr.mxu0 0.0
        %423 = vmatpush1.msra.mxu0 %v224
        %424 = vmatprep.subr.mxu0 0.0
        %425 = vmatpush1.msra.mxu0 %v227
        %426 = vmatprep.subr.mxu0 0.0
        %427 = vmatpush1.msra.mxu0 %v230
        %428 = vmatprep.subr.mxu0 0.0
        %429 = vmatpush1.msra.mxu0 %v233
        %430 = vmatprep.subr.mxu0 0.0
        %431 = vmatpush1.msra.mxu0 %v236
        %432 = vmatprep.subr.mxu0 0.0
        %433 = vmatpush1.msra.mxu0 %v239
        %434 = vmatprep.subr.mxu0 0.0
        %435 = vmatpush1.msra.mxu0 %v242
        %436 = vmatprep.subr.mxu0 0.0
        %437 = vmatpush1.msra.mxu0 0.0
        %438 = vmatprep.subr.mxu0 0.0
        %439 = vmatpush1.msra.mxu0 0.0
        %440 = vmatprep.subr.mxu0 0.0
        %441 = vmatpush1.msra.mxu0 0.0
        %442 = vmatprep.subr.mxu0 0.0
        %443 = vmatpush1.msra.mxu0 0.0
        %444 = vmatprep.subr.mxu0 0.0
        %445 = vmatpush1.msra.mxu0 0.0
        %446 = vmatprep.subr.mxu0 0.0
        %447 = vmatpush1.msra.mxu0 0.0
        %448 = vmatprep.subr.mxu0 0.0
        %449 = vmatpush1.msra.mxu0 0.0
        %450 = vmatprep.subr.mxu0 0.0
        %451 = vmatpush1.msra.mxu0 0.0
        %452 = vmatprep.subr.mxu0 0.0
        %453 = vmatpush1.msra.mxu0 0.0
        %454 = vmatprep.subr.mxu0 0.0
        %455 = vmatpush1.msra.mxu0 0.0
        %456 = vmatprep.subr.mxu0 0.0
        %457 = vmatpush1.msra.mxu0 0.0
        %458 = vmatprep.subr.mxu0 0.0
        %459 = vmatpush1.msra.mxu0 0.0
        %460 = vmatprep.subr.mxu0 0.0
        %461 = vmatpush1.msra.mxu0 0.0
        %462 = vmatprep.subr.mxu0 0.0
        %463 = vmatpush1.msra.mxu0 0.0
        %464 = vmatprep.subr.mxu0 0.0
        %465 = vmatpush1.msra.mxu0 0.0
        %466 = vmatprep.subr.mxu0 0.0
        %467 = vmatpush1.msra.mxu0 0.0
        %468 = vmatprep.mubr.f32.mxu0 0.0
        %469 = vmatmul.mubr.f32.gmra.mrb[0].mxu0 %v179
        %v470 = vpop.f32.mrb[0].mxu0
        %v471 = vadd.f32 0.0, %v470
        %v472 = vpop.f32.mrb[0].mxu0
        %473 = vmatprep.mubr.f32.mxu0 0.0
        %474 = vmatmul.mubr.f32.gmra.mrb[0].mxu0 %v180
        %v475 = vpop.f32.mrb[0].mxu0
        %v476 = vadd.f32 0.0, %v475
        %v477 = vpop.f32.mrb[0].mxu0
        %478 = vmatprep.mubr.f32.mxu0 0.0
        %479 = vmatmul.mubr.f32.gmra.mrb[0].mxu0 %v181
        %v480 = vpop.f32.mrb[0].mxu0
        %v481 = vadd.f32 0.0, %v480
        %v482 = vpop.f32.mrb[0].mxu0
        %483 = vmatprep.mubr.f32.mxu0 0.0
        %484 = vmatmul.mubr.f32.gmra.mrb[0].mxu0 %v182
        %v485 = vpop.f32.mrb[0].mxu0
        %v486 = vadd.f32 0.0, %v485
        %v487 = vpop.f32.mrb[0].mxu0
        %488 = vmatprep.mubr.f32.mxu0 0.0
        %489 = vmatmul.mubr.f32.gmra.mrb[0].mxu0 %v183
        %v490 = vpop.f32.mrb[0].mxu0
        %v491 = vadd.f32 0.0, %v490
        %v492 = vpop.f32.mrb[0].mxu0
        %493 = vmatprep.mubr.f32.mxu0 0.0
        %494 = vmatmul.mubr.f32.gmra.mrb[0].mxu0 %v184
        %v495 = vpop.f32.mrb[0].mxu0
        %v496 = vadd.f32 0.0, %v495
        %v497 = vpop.f32.mrb[0].mxu0
        %498 = vmatprep.mubr.f32.mxu0 0.0
        %499 = vmatmul.mubr.f32.gmra.mrb[0].mxu0 %v185
        %v500 = vpop.f32.mrb[0].mxu0
        %v501 = vadd.f32 0.0, %v500
        %v502 = vpop.f32.mrb[0].mxu0
        %503 = vmatprep.mubr.f32.mxu0 0.0
        %504 = vmatmul.mubr.f32.gmra.mrb[0].mxu0 %v186
        %v505 = vpop.f32.mrb[0].mxu0
        %v506 = vadd.f32 0.0, %v505
        %v507 = vpop.f32.mrb[0].mxu0
        %508 = vmatprep.mubr.f32.mxu0 0.0
        %509 = vmatmul.mubr.f32.gmra.mrb[0].mxu0 %v187
        %v510 = vpop.f32.mrb[0].mxu0
        %v511 = vadd.f32 0.0, %v510
        %v512 = vpop.f32.mrb[0].mxu0
        %513 = vmatprep.mubr.f32.mxu0 0.0
        %514 = vmatmul.mubr.f32.gmra.mrb[0].mxu0 %v188
        %v515 = vpop.f32.mrb[0].mxu0
        %v516 = vadd.f32 0.0, %v515
        %v517 = vpop.f32.mrb[0].mxu0
        %518 = vmatprep.mubr.f32.mxu0 0.0
        %519 = vmatmul.mubr.f32.gmra.mrb[0].mxu0 %v189
        %v520 = vpop.f32.mrb[0].mxu0
        %v521 = vadd.f32 0.0, %v520
        %v522 = vpop.f32.mrb[0].mxu0
        %523 = vmatprep.mubr.f32.mxu0 0.0
        %524 = vmatmul.mubr.f32.gmra.mrb[0].mxu0 %v190
        %v525 = vpop.f32.mrb[0].mxu0
        %v526 = vadd.f32 0.0, %v525
        %v527 = vpop.f32.mrb[0].mxu0
        %528 = vmatprep.mubr.f32.mxu0 0.0
        %529 = vmatmul.mubr.f32.gmra.mrb[0].mxu0 %v191
        %v530 = vpop.f32.mrb[0].mxu0
        %v531 = vadd.f32 0.0, %v530
        %v532 = vpop.f32.mrb[0].mxu0
        %533 = vmatprep.mubr.f32.mxu0 0.0
        %534 = vmatmul.mubr.f32.gmra.mrb[0].mxu0 %v192
        %v535 = vpop.f32.mrb[0].mxu0
        %v536 = vadd.f32 0.0, %v535
        %v537 = vpop.f32.mrb[0].mxu0
        %538 = vmatprep.mubr.f32.mxu0 0.0
        %539 = vmatmul.mubr.f32.gmra.mrb[0].mxu0 %v193
        %v540 = vpop.f32.mrb[0].mxu0
        %v541 = vadd.f32 0.0, %v540
        %v542 = vpop.f32.mrb[0].mxu0
        %543 = vmatprep.mubr.f32.mxu0 0.0
        %544 = vmatmul.mubr.f32.gmra.mrb[0].mxu0 %v194
        %v545 = vpop.f32.mrb[0].mxu0
        %v546 = vadd.f32 0.0, %v545
        %v547 = vpop.f32.mrb[0].mxu0
        %548 = vdwg.mxu0
        %549 = vst [vmem:[%s176] sm:$0xff] %v310
        %550 = vst [vmem:[%s176 + $0x8] sm:$0xff] %v312
        %551 = vst [vmem:[%s176 + $0x10] sm:$0xff] %v471
        %552 = vst [vmem:[%s176 + $0x18] sm:$0xff] %v316
        %553 = vst [vmem:[%s176 + $0x20] sm:$0xff] %v318
        %554 = vst [vmem:[%s176 + $0x28] sm:$0xff] %v476
        %555 = vst [vmem:[%s176 + $0x30] sm:$0xff] %v322
        %556 = vst [vmem:[%s176 + $0x38] sm:$0xff] %v324
        %557 = vst [vmem:[%s176 + $0x40] sm:$0xff] %v481
        %558 = vst [vmem:[%s176 + $0x48] sm:$0xff] %v328
        %559 = vst [vmem:[%s176 + $0x50] sm:$0xff] %v330
        %560 = vst [vmem:[%s176 + $0x58] sm:$0xff] %v486
        %561 = vst [vmem:[%s176 + $0x60] sm:$0xff] %v334
        %562 = vst [vmem:[%s176 + $0x68] sm:$0xff] %v336
        %563 = vst [vmem:[%s176 + $0x70] sm:$0xff] %v491
        %564 = vst [vmem:[%s176 + $0x78] sm:$0xff] %v340
        %565 = vst [vmem:[%s176 + $0x80] sm:$0xff] %v342
        %566 = vst [vmem:[%s176 + $0x88] sm:$0xff] %v496
        %567 = vst [vmem:[%s176 + $0x90] sm:$0xff] %v346
        %568 = vst [vmem:[%s176 + $0x98] sm:$0xff] %v348
        %569 = vst [vmem:[%s176 + $0xa0] sm:$0xff] %v501
        %570 = vst [vmem:[%s176 + $0xa8] sm:$0xff] %v352
        %571 = vst [vmem:[%s176 + $0xb0] sm:$0xff] %v354
        %572 = vst [vmem:[%s176 + $0xb8] sm:$0xff] %v506
        %573 = vst [vmem:[%s176 + $0xc0] sm:$0xff] %v358
        %574 = vst [vmem:[%s176 + $0xc8] sm:$0xff] %v360
        %575 = vst [vmem:[%s176 + $0xd0] sm:$0xff] %v511
        %576 = vst [vmem:[%s176 + $0xd8] sm:$0xff] %v364
        %577 = vst [vmem:[%s176 + $0xe0] sm:$0xff] %v366
        %578 = vst [vmem:[%s176 + $0xe8] sm:$0xff] %v516
        %579 = vst [vmem:[%s176 + $0xf0] sm:$0xff] %v370
        %580 = vst [vmem:[%s176 + $0xf8] sm:$0xff] %v372
        %581 = vst [vmem:[%s176 + $0x100] sm:$0xff] %v521
        %582 = vst [vmem:[%s176 + $0x108] sm:$0xff] %v376
        %583 = vst [vmem:[%s176 + $0x110] sm:$0xff] %v378
        %584 = vst [vmem:[%s176 + $0x118] sm:$0xff] %v526
        %585 = vst [vmem:[%s176 + $0x120] sm:$0xff] %v382
        %586 = vst [vmem:[%s176 + $0x128] sm:$0xff] %v384
        %587 = vst [vmem:[%s176 + $0x130] sm:$0xff] %v531
        %588 = vst [vmem:[%s176 + $0x138] sm:$0xff] %v388
        %589 = vst [vmem:[%s176 + $0x140] sm:$0xff] %v390
        %590 = vst [vmem:[%s176 + $0x148] sm:$0xff] %v536
        %591 = vst [vmem:[%s176 + $0x150] sm:$0xff] %v394
        %592 = vst [vmem:[%s176 + $0x158] sm:$0xff] %v396
        %593 = vst [vmem:[%s176 + $0x160] sm:$0xff] %v541
        %594 = vst [vmem:[%s176 + $0x168] sm:$0xff] %v400
        %595 = vst [vmem:[%s176 + $0x170] sm:$0xff] %v402
        %596 = vst [vmem:[%s176 + $0x178] sm:$0xff] %v546
        %s597 = sand.u32 %s75, 1
        %s598 = scalar_lea.sflag [#allocation4], %s597
        %s599 = sand.u32 %s75, 1
        %s600 = smul.addr %s599, 384
        %s601 = scalar_lea.vmem [#allocation7], %s600
        // Predicated region
        $region37: #{tpu_custom_call.1} parent=27 // pred_check
          %p602 = pneg %p85
        $region38: #{tpu_custom_call.1} parent=27 // pred_check_branch
          %604 = sbr.rel (%p602) target = $region40
        $region39: #{tpu_custom_call.1} parent=27 // pred_region
          %s605 = smul.u32 16, %s20
          %s607 = ssub.s32 6144, 6144
          %608 = vsyncadd %s598, %s607
          %s609 = smul.addr %s605, 3
          %s610 = smul.addr %s609, 128
          %s611 = scalar_lea.hbm %s2, %s610
          %s612 = sshll.u32 %s601, 4
          %s613 = int_to_ptr.vmem [resolvable:$true] %s612
          %618 = dma.vmem_to_hbm [thread:$0]  %s613, 6144, %s611, %s598, 384, 384, 24
        $region40: #{tpu_custom_call.1} parent=27 // pred_fallthru
          _
      $region28: #{tpu_custom_call.1} parent=5 // pred_fallthru
        _
      %p619 = scmp.le.s32.totalorder 2, %s15
      // Predicated region
      $region41: #{tpu_custom_call.1} parent=5 // pred_check
        %p620 = pneg %p619
      $region42: #{tpu_custom_call.1} parent=5 // pred_check_branch
        %622 = sbr.rel (%p620) target = $region44
      $region43: #{tpu_custom_call.1} parent=5 // pred_region
        %s623 = ssub.s32 %s15, 2
        // Predicated region
        $region45: #{tpu_custom_call.1} parent=43 // pred_check
          %p624 = pneg %p91
        $region46: #{tpu_custom_call.1} parent=43 // pred_check_branch
          %626 = sbr.rel (%p624) target = $region48
        $region47: #{tpu_custom_call.1} parent=43 // pred_region
          %s627 = sand.u32 %s76, 1
          %s628 = scalar_lea.sflag [#allocation4], %s627
          %s629 = sand.u32 %s76, 1
          %s630 = smul.addr %s629, 384
          %s631 = scalar_lea.vmem [#allocation7], %s630
          %632 = dma.done %s628, 6144
        $region48: #{tpu_custom_call.1} parent=43 // pred_fallthru
          _
      $region44: #{tpu_custom_call.1} parent=5 // pred_fallthru
        _
    $region6: #{tpu_custom_call.1} parent=1 // loop_footer
      %s19 = sadd.s32 1, %s15
    $region7: #{tpu_custom_call.1} parent=1 // loop_footer_branch
      %14 = sbr.rel target = $region3
    $region8: #{tpu_custom_call.1} parent=1 // loop_exit
      _
    %633 = vsyncpa [#allocation3], 1
    %s634 = scalar_lea.sflag [#allocation3], 1
    %635 = vsyncpa %s634, 1
    %636 = vsyncpa [#allocation6], 1
    %637 = vsyncpa [#allocation4], 1
    %s638 = scalar_lea.sflag [#allocation4], 1
    %639 = vsyncpa %s638, 1

</llo_original>
